<compile_context>
chip_gen: v5e
topology: v5e:2x2
jax: 0.10.0
libtpu: 0.0.40
codegen_flags: <defaults>
</compile_context>

<pallas_src>
import math
from functools import partial

import jax
import jax.numpy as jnp
from jax import lax
from jax.experimental import pallas as pl
from jax.experimental.pallas import tpu as pltpu

HIDDEN_DIM = 32
NUM_HEADS = 8
LN_EPS = 1e-5
NEG_INF = -1e9


def _cross_modal_attn_kernel(q_ref, kv_ref, mask_ref, w_ref, vmask_ref, vec_ref,
                             out_ref, *, num_heads, head_dim):
    """Fused cross-attention + residual + LayerNorm for one batch element.

    q_ref    : (Lq, E)      f32 queries (also the residual input)
    kv_ref   : (Lk, E)      bf16 keys/values
    mask_ref : (1, Lk)      f32 additive key-padding mask (0 / -1e9)
    w_ref    : (E, 4E)      bf16 packed [Wq | Wk | Wv | Wo], each (in, out)
    vmask_ref: (H*Lk, E)    bf16 0/1 per-head block mask (row r -> head r//Lk,
                            col c -> head c//D)
    vec_ref  : (8, E)       f32 packed rows [bq, bk, bv, bo, gamma, beta, 0, 0]
    out_ref  : (Lq, E)
    """
    E = q_ref.shape[-1]
    scale = 1.0 / math.sqrt(head_dim)

    q_f32 = q_ref[...]                               # residual / LN path stays f32
    q_bf = q_f32.astype(jnp.bfloat16)
    kv = kv_ref[...]                                 # bf16
    w = w_ref[...]                                   # bf16 (E, 4E)
    vmask = vmask_ref[...]                           # bf16 (H*Lk, E)
    vec = vec_ref[...]                               # f32  (8, E)
    bq, bk, bv = vec[0:1, :], vec[1:2, :], vec[2:3, :]
    bo, gamma, beta = vec[3:4, :], vec[4:5, :], vec[5:6, :]

    # --- fused input projections (bf16 MXU, f32 accumulate) ---
    qp = jnp.dot(q_bf, w[:, :E], preferred_element_type=jnp.float32) + bq       # (Lq, E)
    kvp = jnp.dot(kv, w[:, E:3 * E], preferred_element_type=jnp.float32)        # (Lk, 2E)
    kp = kvp[:, :E] + bk                                                         # (Lk, E)
    vp = kvp[:, E:] + bv                                                         # (Lk, E)

    # --- wide per-head K / V: rows replicated over heads, other heads' dims
    #     zeroed by the precomputed block mask (no transpose, no iota) ---
    kw = jnp.tile(kp.astype(jnp.bfloat16), (num_heads, 1)) * vmask               # (H*Lk, E)
    vw = jnp.tile(vp.astype(jnp.bfloat16), (num_heads, 1)) * vmask               # (H*Lk, E)

    # --- scores for all heads in one MXU dot, contracting E directly ---
    s = lax.dot_general(qp.astype(jnp.bfloat16), kw,
                        dimension_numbers=(((1,), (1,)), ((), ())),
                        preferred_element_type=jnp.float32) * scale              # (Lq, H*Lk)
    # key-padding mask is head-independent: broadcast across the H column blocks
    s = s + jnp.tile(mask_ref[...], (1, num_heads))
    # Global per-row max: exact for per-head softmax (constant shift per
    # (row, head)).  A head whose logits sit far below the row max can
    # underflow num/den to 0; the den guard below keeps that finite.
    s = s - jnp.max(s, axis=-1, keepdims=True)
    p = jnp.exp(s)                                                               # f32 (Lq, H*Lk)

    # --- fused numerator/denominator: one dot against [V_wide | vmask] ---
    rhs = jnp.concatenate([vw, vmask], axis=1)                                   # (H*Lk, 2E)
    nd = jnp.dot(p.astype(jnp.bfloat16), rhs, preferred_element_type=jnp.float32)
    num, den = nd[:, :E], nd[:, E:]
    attn = num / jnp.maximum(den, 1e-20)   # exact division (per review); guard 0/0

    # --- output projection + residual + LayerNorm (dropout = identity) ---
    o = jnp.dot(attn.astype(jnp.bfloat16), w[:, 3 * E:],
                preferred_element_type=jnp.float32) + bo
    y = q_f32 + o
    mu = jnp.mean(y, axis=-1, keepdims=True)
    var = jnp.maximum(jnp.mean(y * y, axis=-1, keepdims=True) - mu * mu, 0.0)
    out_ref[...] = ((y - mu) * lax.rsqrt(var + LN_EPS) * gamma + beta).astype(out_ref.dtype)


def cross_modal_attention(query, key_value, params, key_padding_mask=None,
                          *, num_heads=NUM_HEADS):
    """query: (B, Lq, E), key_value: (B, Lk, E), key_padding_mask: (B, Lk) bool (True = pad)."""
    B, Lq, E = query.shape
    _, Lk, _ = key_value.shape
    assert E % num_heads == 0
    D = E // num_heads
    HLk = num_heads * Lk

    # Additive key-padding mask, head/query independent: (B, 1, Lk).
    if key_padding_mask is not None:
        add_mask = jnp.where(key_padding_mask, NEG_INF, 0.0).astype(jnp.float32)
    else:
        add_mask = jnp.zeros((B, Lk), jnp.float32)
    add_mask = add_mask.reshape(B, 1, Lk)

    # Static per-head 0/1 block mask (H*Lk, E), precomputed once in the wrapper.
    vmask = (jnp.arange(HLk)[:, None] // Lk
             == jnp.arange(E)[None, :] // D).astype(jnp.bfloat16)                # (HLk, E)

    # Pack weights (PyTorch (out,in) -> (in,out)) into one lane-dense bf16 slab
    # and the six bias / LayerNorm vectors into a single (8, E) f32 block.
    w_all = jnp.concatenate(
        [params["wq"].T, params["wk"].T, params["wv"].T, params["wo"].T], axis=1
    ).astype(jnp.bfloat16)                                                        # (E, 4E)
    zeros = jnp.zeros((E,), jnp.float32)
    vec = jnp.stack([params["bq"], params["bk"], params["bv"], params["bo"],
                     params["ln_gamma"], params["ln_beta"], zeros, zeros],
                    axis=0).astype(jnp.float32)                                   # (8, E)

    kv_bf = key_value.astype(jnp.bfloat16)

    kernel = partial(_cross_modal_attn_kernel, num_heads=num_heads, head_dim=D)
    out = pl.pallas_call(
        kernel,
        out_shape=jax.ShapeDtypeStruct((B, Lq, E), query.dtype),
        grid=(B,),
        in_specs=[
            pl.BlockSpec((None, Lq, E), lambda b: (b, 0, 0)),    # query (f32)
            pl.BlockSpec((None, Lk, E), lambda b: (b, 0, 0)),    # key/value (bf16)
            pl.BlockSpec((None, 1, Lk), lambda b: (b, 0, 0)),    # key-padding add-mask
            pl.BlockSpec((E, 4 * E), lambda b: (0, 0)),          # packed weights
            pl.BlockSpec((HLk, E), lambda b: (0, 0)),            # per-head block mask
            pl.BlockSpec((8, E), lambda b: (0, 0)),              # packed bias/LN vectors
        ],
        out_specs=pl.BlockSpec((None, Lq, E), lambda b: (b, 0, 0)),
        compiler_params=pltpu.CompilerParams(dimension_semantics=("parallel",)),
    )(query, kv_bf, add_mask, w_all, vmask, vec)
    return out


def _reference(query, key_value, params, key_padding_mask, num_heads):
    """Pure-JAX f32 reference matching nn.MultiheadAttention (eval mode) semantics."""
    B, Lq, E = query.shape
    Lk = key_value.shape[1]
    D = E // num_heads
    q = query @ params["wq"].T + params["bq"]
    k = key_value @ params["wk"].T + params["bk"]
    v = key_value @ params["wv"].T + params["bv"]
    q = q.reshape(B, Lq, num_heads, D).transpose(0, 2, 1, 3)
    k = k.reshape(B, Lk, num_heads, D).transpose(0, 2, 1, 3)
    v = v.reshape(B, Lk, num_heads, D).transpose(0, 2, 1, 3)
    s = jnp.einsum("bhqd,bhkd->bhqk", q, k) / math.sqrt(D)
    if key_padding_mask is not None:
        s = s + jnp.where(key_padding_mask[:, None, None, :], NEG_INF, 0.0)
    p = jax.nn.softmax(s, axis=-1)
    o = jnp.einsum("bhqk,bhkd->bhqd", p, v).transpose(0, 2, 1, 3).reshape(B, Lq, E)
    o = o @ params["wo"].T + params["bo"]
    y = query + o
    mu = y.mean(-1, keepdims=True)
    var = ((y - mu) ** 2).mean(-1, keepdims=True)
    return (y - mu) / jnp.sqrt(var + LN_EPS) * params["ln_gamma"] + params["ln_beta"]


def _init_params(key, hidden_dim):
    ks = jax.random.split(key, 8)
    s = 1.0 / math.sqrt(hidden_dim)
    return {
        "wq": jax.random.normal(ks[0], (hidden_dim, hidden_dim), jnp.float32) * s,
        "wk": jax.random.normal(ks[1], (hidden_dim, hidden_dim), jnp.float32) * s,
        "wv": jax.random.normal(ks[2], (hidden_dim, hidden_dim), jnp.float32) * s,
        "bq": jax.random.normal(ks[3], (hidden_dim,), jnp.float32) * 0.01,
        "bk": jax.random.normal(ks[4], (hidden_dim,), jnp.float32) * 0.01,
        "bv": jax.random.normal(ks[5], (hidden_dim,), jnp.float32) * 0.01,
        "wo": jax.random.normal(ks[6], (hidden_dim, hidden_dim), jnp.float32) * s,
        "bo": jnp.zeros((hidden_dim,), jnp.float32),
        "ln_gamma": jnp.ones((hidden_dim,), jnp.float32)
                    + 0.1 * jax.random.normal(ks[7], (hidden_dim,), jnp.float32),
        "ln_beta": jnp.zeros((hidden_dim,), jnp.float32),
    }


if __name__ == "__main__":
    key = jax.random.PRNGKey(0)
    k_q, k_kv, k_p = jax.random.split(key, 3)

    B, Lq, Lk, E = 2, 8, 16, HIDDEN_DIM
    query = jax.random.normal(k_q, (B, Lq, E), jnp.float32)
    key_value = jax.random.normal(k_kv, (B, Lk, E), jnp.float32)
    # mask out the last 4 key positions of the second batch element
    key_padding_mask = jnp.zeros((B, Lk), bool).at[1, -4:].set(True)

    params = _init_params(k_p, E)

    out = cross_modal_attention(query, key_value, params, key_padding_mask,
                                num_heads=NUM_HEADS)
    out = jax.block_until_ready(out)

    ref = _reference(query, key_value, params, key_padding_mask, NUM_HEADS)
    assert out.shape == (B, Lq, E)
    assert bool(jnp.all(jnp.isfinite(out)))
    # Tolerance accounts for bf16 MXU operands (per perf review); the
    # softmax/exp/LayerNorm math and accumulation are all f32, so observed
    # error is ~1e-2 worst-case against the f32 reference.
    max_err = float(jnp.max(jnp.abs(out - ref)))
    assert max_err < 5e-2, f"max err {max_err}"

    print("KERNEL_OK")
</pallas_src>

<mosaic_0001>
module attributes {stable_mosaic.version = 11 : i64} {
  func.func @_cross_modal_attn_kernel(%arg0: i32, %arg1: memref<1x8x32xf32, #tpu.memory_space<vmem>>, %arg2: memref<1x16x32xbf16, #tpu.memory_space<vmem>>, %arg3: memref<1x1x16xf32, #tpu.memory_space<vmem>>, %arg4: memref<32x128xbf16, #tpu.memory_space<vmem>>, %arg5: memref<128x32xbf16, #tpu.memory_space<vmem>>, %arg6: memref<8x32xf32, #tpu.memory_space<vmem>>, %arg7: memref<1x8x32xf32, #tpu.memory_space<vmem>>) attributes {dimension_semantics = [#tpu.dimension_semantics<parallel>], iteration_bounds = array<i64: 2>, scalar_prefetch = 0 : i64, scratch_operands = 0 : i64, tpu.core_type = #tpu.core_type<tc>, window_params = [{transform_indices = @transform_0, window_bounds = array<i64: 1, 8, 32>}, {transform_indices = @transform_1, window_bounds = array<i64: 1, 16, 32>}, {transform_indices = @transform_2, window_bounds = array<i64: 1, 1, 16>}, {pipeline_mode = #tpu.pipeline_mode<synchronous>, transform_indices = @transform_3, window_bounds = array<i64: 32, 128>}, {pipeline_mode = #tpu.pipeline_mode<synchronous>, transform_indices = @transform_4, window_bounds = array<i64: 128, 32>}, {pipeline_mode = #tpu.pipeline_mode<synchronous>, transform_indices = @transform_5, window_bounds = array<i64: 8, 32>}, {transform_indices = @transform_6, window_bounds = array<i64: 1, 8, 32>}]} {
    %c0 = arith.constant 0 : index
    %c0_0 = arith.constant 0 : index
    %c0_1 = arith.constant 0 : index
    %0 = vector.load %arg1[%c0, %c0_0, %c0_1] : memref<1x8x32xf32, #tpu.memory_space<vmem>>, vector<1x8x32xf32>
    %1 = vector.shape_cast %0 : vector<1x8x32xf32> to vector<8x32xf32>
    %2 = arith.truncf %1 : vector<8x32xf32> to vector<8x32xbf16>
    %c0_2 = arith.constant 0 : index
    %c0_3 = arith.constant 0 : index
    %c0_4 = arith.constant 0 : index
    %3 = vector.load %arg2[%c0_2, %c0_3, %c0_4] : memref<1x16x32xbf16, #tpu.memory_space<vmem>>, vector<1x16x32xbf16>
    %4 = vector.shape_cast %3 : vector<1x16x32xbf16> to vector<16x32xbf16>
    %c0_5 = arith.constant 0 : index
    %c0_6 = arith.constant 0 : index
    %5 = vector.load %arg4[%c0_5, %c0_6] : memref<32x128xbf16, #tpu.memory_space<vmem>>, vector<32x128xbf16>
    %c0_7 = arith.constant 0 : index
    %c0_8 = arith.constant 0 : index
    %6 = vector.load %arg5[%c0_7, %c0_8] : memref<128x32xbf16, #tpu.memory_space<vmem>>, vector<128x32xbf16>
    %c0_9 = arith.constant 0 : index
    %c0_10 = arith.constant 0 : index
    %7 = vector.load %arg6[%c0_9, %c0_10] : memref<8x32xf32, #tpu.memory_space<vmem>>, vector<8x32xf32>
    %8 = vector.extract_strided_slice %7 {offsets = [0, 0], sizes = [1, 32], strides = [1, 1]} : vector<8x32xf32> to vector<1x32xf32>
    %9 = vector.extract_strided_slice %7 {offsets = [1, 0], sizes = [1, 32], strides = [1, 1]} : vector<8x32xf32> to vector<1x32xf32>
    %10 = vector.extract_strided_slice %7 {offsets = [2, 0], sizes = [1, 32], strides = [1, 1]} : vector<8x32xf32> to vector<1x32xf32>
    %11 = vector.extract_strided_slice %7 {offsets = [3, 0], sizes = [1, 32], strides = [1, 1]} : vector<8x32xf32> to vector<1x32xf32>
    %12 = vector.extract_strided_slice %7 {offsets = [4, 0], sizes = [1, 32], strides = [1, 1]} : vector<8x32xf32> to vector<1x32xf32>
    %13 = vector.extract_strided_slice %7 {offsets = [5, 0], sizes = [1, 32], strides = [1, 1]} : vector<8x32xf32> to vector<1x32xf32>
    %14 = vector.extract_strided_slice %5 {offsets = [0, 0], sizes = [32, 32], strides = [1, 1]} : vector<32x128xbf16> to vector<32x32xbf16>
    %cst = arith.constant dense<0.000000e+00> : vector<8x32xf32>
    %15 = tpu.matmul %2, %14, %cst {dimension_numbers = #tpu.dot_dimension_numbers<[1], [0], [0], [1], [0, 0, 1, 1], [], []>} : vector<8x32xbf16>, vector<32x32xbf16>, vector<8x32xf32> -> vector<8x32xf32>
    %16 = vector.broadcast %8 : vector<1x32xf32> to vector<8x32xf32>
    %17 = arith.addf %15, %16 : vector<8x32xf32>
    %18 = vector.extract_strided_slice %5 {offsets = [0, 32], sizes = [32, 64], strides = [1, 1]} : vector<32x128xbf16> to vector<32x64xbf16>
    %cst_11 = arith.constant dense<0.000000e+00> : vector<16x64xf32>
    %19 = tpu.matmul %4, %18, %cst_11 {dimension_numbers = #tpu.dot_dimension_numbers<[1], [0], [0], [1], [0, 0, 1, 1], [], []>} : vector<16x32xbf16>, vector<32x64xbf16>, vector<16x64xf32> -> vector<16x64xf32>
    %20 = vector.extract_strided_slice %19 {offsets = [0, 0], sizes = [16, 32], strides = [1, 1]} : vector<16x64xf32> to vector<16x32xf32>
    %21 = vector.broadcast %9 : vector<1x32xf32> to vector<16x32xf32>
    %22 = arith.addf %20, %21 : vector<16x32xf32>
    %23 = vector.extract_strided_slice %19 {offsets = [0, 32], sizes = [16, 32], strides = [1, 1]} : vector<16x64xf32> to vector<16x32xf32>
    %24 = vector.broadcast %10 : vector<1x32xf32> to vector<16x32xf32>
    %25 = arith.addf %23, %24 : vector<16x32xf32>
    %26 = arith.truncf %22 : vector<16x32xf32> to vector<16x32xbf16>
    %27 = tpu.concatenate %26, %26, %26, %26, %26, %26, %26, %26 in 0 : vector<16x32xbf16>, vector<16x32xbf16>, vector<16x32xbf16>, vector<16x32xbf16>, vector<16x32xbf16>, vector<16x32xbf16>, vector<16x32xbf16>, vector<16x32xbf16> -> vector<128x32xbf16>
    %28 = arith.mulf %27, %6 : vector<128x32xbf16>
    %29 = arith.truncf %25 : vector<16x32xf32> to vector<16x32xbf16>
    %30 = tpu.concatenate %29, %29, %29, %29, %29, %29, %29, %29 in 0 : vector<16x32xbf16>, vector<16x32xbf16>, vector<16x32xbf16>, vector<16x32xbf16>, vector<16x32xbf16>, vector<16x32xbf16>, vector<16x32xbf16>, vector<16x32xbf16> -> vector<128x32xbf16>
    %31 = arith.mulf %30, %6 : vector<128x32xbf16>
    %32 = arith.truncf %17 : vector<8x32xf32> to vector<8x32xbf16>
    %cst_12 = arith.constant dense<0.000000e+00> : vector<8x128xf32>
    %33 = tpu.matmul %32, %28, %cst_12 {dimension_numbers = #tpu.dot_dimension_numbers<[1], [1], [0], [0], [0, 0, 1, 0], [], []>} : vector<8x32xbf16>, vector<128x32xbf16>, vector<8x128xf32> -> vector<8x128xf32>
    %cst_13 = arith.constant 5.000000e-01 : f32
    %34 = vector.broadcast %cst_13 : f32 to vector<8x128xf32>
    %35 = arith.mulf %33, %34 : vector<8x128xf32>
    %c0_14 = arith.constant 0 : index
    %c0_15 = arith.constant 0 : index
    %c0_16 = arith.constant 0 : index
    %36 = vector.load %arg3[%c0_14, %c0_15, %c0_16] : memref<1x1x16xf32, #tpu.memory_space<vmem>>, vector<1x1x16xf32>
    %37 = vector.shape_cast %36 : vector<1x1x16xf32> to vector<1x16xf32>
    %38 = tpu.concatenate %37, %37, %37, %37, %37, %37, %37, %37 in 1 : vector<1x16xf32>, vector<1x16xf32>, vector<1x16xf32>, vector<1x16xf32>, vector<1x16xf32>, vector<1x16xf32>, vector<1x16xf32>, vector<1x16xf32> -> vector<1x128xf32>
    %39 = vector.broadcast %38 : vector<1x128xf32> to vector<8x128xf32>
    %40 = arith.addf %35, %39 : vector<8x128xf32>
    %cst_17 = arith.constant dense<0xFF800000> : vector<8xf32>
    %41 = vector.multi_reduction <maximumf>, %40, %cst_17 [1] : vector<8x128xf32> to vector<8xf32>
    %42 = vector.shape_cast %41 : vector<8xf32> to vector<8x1xf32>
    %43 = vector.broadcast %42 : vector<8x1xf32> to vector<8x128xf32>
    %44 = arith.subf %40, %43 : vector<8x128xf32>
    %45 = math.exp %44 : vector<8x128xf32>
    %46 = tpu.concatenate %31, %6 in 1 : vector<128x32xbf16>, vector<128x32xbf16> -> vector<128x64xbf16>
    %47 = arith.truncf %45 : vector<8x128xf32> to vector<8x128xbf16>
    %cst_18 = arith.constant dense<0.000000e+00> : vector<8x64xf32>
    %48 = tpu.matmul %47, %46, %cst_18 {dimension_numbers = #tpu.dot_dimension_numbers<[1], [0], [0], [1], [0, 0, 1, 1], [], []>} : vector<8x128xbf16>, vector<128x64xbf16>, vector<8x64xf32> -> vector<8x64xf32>
    %49 = vector.extract_strided_slice %48 {offsets = [0, 0], sizes = [8, 32], strides = [1, 1]} : vector<8x64xf32> to vector<8x32xf32>
    %50 = vector.extract_strided_slice %48 {offsets = [0, 32], sizes = [8, 32], strides = [1, 1]} : vector<8x64xf32> to vector<8x32xf32>
    %cst_19 = arith.constant 9.99999968E-21 : f32
    %51 = vector.broadcast %cst_19 : f32 to vector<8x32xf32>
    %52 = arith.maximumf %50, %51 : vector<8x32xf32>
    %53 = arith.divf %49, %52 : vector<8x32xf32>
    %54 = arith.truncf %53 : vector<8x32xf32> to vector<8x32xbf16>
    %55 = vector.extract_strided_slice %5 {offsets = [0, 96], sizes = [32, 32], strides = [1, 1]} : vector<32x128xbf16> to vector<32x32xbf16>
    %cst_20 = arith.constant dense<0.000000e+00> : vector<8x32xf32>
    %56 = tpu.matmul %54, %55, %cst_20 {dimension_numbers = #tpu.dot_dimension_numbers<[1], [0], [0], [1], [0, 0, 1, 1], [], []>} : vector<8x32xbf16>, vector<32x32xbf16>, vector<8x32xf32> -> vector<8x32xf32>
    %57 = vector.broadcast %11 : vector<1x32xf32> to vector<8x32xf32>
    %58 = arith.addf %56, %57 : vector<8x32xf32>
    %59 = arith.addf %1, %58 : vector<8x32xf32>
    %cst_21 = arith.constant dense<0.000000e+00> : vector<8xf32>
    %60 = vector.multi_reduction <add>, %59, %cst_21 [1] : vector<8x32xf32> to vector<8xf32>
    %61 = vector.shape_cast %60 : vector<8xf32> to vector<8x1xf32>
    %cst_22 = arith.constant 3.200000e+01 : f32
    %62 = vector.broadcast %cst_22 : f32 to vector<8x1xf32>
    %63 = arith.divf %61, %62 : vector<8x1xf32>
    %64 = arith.mulf %59, %59 : vector<8x32xf32>
    %cst_23 = arith.constant dense<0.000000e+00> : vector<8xf32>
    %65 = vector.multi_reduction <add>, %64, %cst_23 [1] : vector<8x32xf32> to vector<8xf32>
    %66 = vector.shape_cast %65 : vector<8xf32> to vector<8x1xf32>
    %cst_24 = arith.constant 3.200000e+01 : f32
    %67 = vector.broadcast %cst_24 : f32 to vector<8x1xf32>
    %68 = arith.divf %66, %67 : vector<8x1xf32>
    %69 = arith.mulf %63, %63 : vector<8x1xf32>
    %70 = arith.subf %68, %69 : vector<8x1xf32>
    %cst_25 = arith.constant 0.000000e+00 : f32
    %71 = vector.broadcast %cst_25 : f32 to vector<8x1xf32>
    %72 = arith.maximumf %70, %71 : vector<8x1xf32>
    %73 = vector.broadcast %63 : vector<8x1xf32> to vector<8x32xf32>
    %74 = arith.subf %59, %73 : vector<8x32xf32>
    %cst_26 = arith.constant 9.99999974E-6 : f32
    %75 = vector.broadcast %cst_26 : f32 to vector<8x1xf32>
    %76 = arith.addf %72, %75 : vector<8x1xf32>
    %77 = math.rsqrt %76 : vector<8x1xf32>
    %78 = vector.broadcast %77 : vector<8x1xf32> to vector<8x32xf32>
    %79 = arith.mulf %74, %78 : vector<8x32xf32>
    %80 = vector.broadcast %12 : vector<1x32xf32> to vector<8x32xf32>
    %81 = arith.mulf %79, %80 : vector<8x32xf32>
    %82 = vector.broadcast %13 : vector<1x32xf32> to vector<8x32xf32>
    %83 = arith.addf %81, %82 : vector<8x32xf32>
    %c0_27 = arith.constant 0 : index
    %c0_28 = arith.constant 0 : index
    %c0_29 = arith.constant 0 : index
    %84 = vector.load %arg7[%c0_27, %c0_28, %c0_29] : memref<1x8x32xf32, #tpu.memory_space<vmem>>, vector<1x8x32xf32>
    %85 = vector.shape_cast %84 : vector<1x8x32xf32> to vector<8x32xf32>
    %86 = vector.shape_cast %83 : vector<8x32xf32> to vector<1x8x32xf32>
    tpu.vector_store %arg7[%c0_27, %c0_28, %c0_29], %86 {strides = array<i32>} : memref<1x8x32xf32, #tpu.memory_space<vmem>>, vector<1x8x32xf32>,
    return
  }
  func.func @transform_0(%arg0: i32) -> (i32, i32, i32) {
    %c0_i32 = arith.constant 0 : i32
    %c0_i32_0 = arith.constant 0 : i32
    %c0_i32_1 = arith.constant 0 : i32
    return %arg0, %c0_i32, %c0_i32_0 : i32, i32, i32
  }
  func.func @transform_1(%arg0: i32) -> (i32, i32, i32) {
    %c0_i32 = arith.constant 0 : i32
    %c0_i32_0 = arith.constant 0 : i32
    %c0_i32_1 = arith.constant 0 : i32
    return %arg0, %c0_i32, %c0_i32_0 : i32, i32, i32
  }
  func.func @transform_2(%arg0: i32) -> (i32, i32, i32) {
    %c0_i32 = arith.constant 0 : i32
    %c0_i32_0 = arith.constant 0 : i32
    %c0_i32_1 = arith.constant 0 : i32
    return %arg0, %c0_i32, %c0_i32_0 : i32, i32, i32
  }
  func.func @transform_3(%arg0: i32) -> (i32, i32) {
    %c0_i32 = arith.constant 0 : i32
    %c0_i32_0 = arith.constant 0 : i32
    %c0_i32_1 = arith.constant 0 : i32
    return %c0_i32, %c0_i32_0 : i32, i32
  }
  func.func @transform_4(%arg0: i32) -> (i32, i32) {
    %c0_i32 = arith.constant 0 : i32
    %c0_i32_0 = arith.constant 0 : i32
    %c0_i32_1 = arith.constant 0 : i32
    return %c0_i32, %c0_i32_0 : i32, i32
  }
  func.func @transform_5(%arg0: i32) -> (i32, i32) {
    %c0_i32 = arith.constant 0 : i32
    %c0_i32_0 = arith.constant 0 : i32
    %c0_i32_1 = arith.constant 0 : i32
    return %c0_i32, %c0_i32_0 : i32, i32
  }
  func.func @transform_6(%arg0: i32) -> (i32, i32, i32) {
    %c0_i32 = arith.constant 0 : i32
    %c0_i32_0 = arith.constant 0 : i32
    %c0_i32_1 = arith.constant 0 : i32
    return %arg0, %c0_i32, %c0_i32_0 : i32, i32, i32
  }
}

</mosaic_0001>

<llo_original>
// kernel: tpu_custom_call.1
$region0: #{tpu_custom_call.1}
  #allocation0 [shape = 'u32[]', space=smem, size = 0x4, offset = 0x4, fixed_abs, tag = 'smem constant byte address 0x4 - core index']
  #allocation1 [shape = 'u32[72,128]{1,0:T(1,128)}', space=vmem, size = 0x9000, scoped, tag = 'internal scratch']
  %s0 = inlined_call_operand.vmem [shape: f32[2,8,32], index: 0, kind: input, shape index: {}]
  %s1 = inlined_call_operand.vmem [shape: bf16[2,16,32], index: 1, kind: input, shape index: {}]
  %s2 = inlined_call_operand.vmem [shape: f32[2,1,16], index: 2, kind: input, shape index: {}]
  %s3 = inlined_call_operand.vmem [shape: bf16[32,128], index: 3, kind: input, shape index: {}]
  %s4 = inlined_call_operand.vmem [shape: bf16[128,32], index: 4, kind: input, shape index: {}]
  %s5 = inlined_call_operand.vmem [shape: f32[8,32], index: 5, kind: input, shape index: {}]
  %s6 = inlined_call_operand.hbm [shape: f32[2,8,32], index: 6, kind: output, shape index: {}]
  %s7 = sld [smem:[#allocation0]]
  $region57: #{tpu_custom_call.1} parent=0
    _
  %s9 = ssub.s32 1, %s7
  %s10 = scalar_select 0, %s9, %s7
  $region1: #{tpu_custom_call.1} parent=0
    #allocation2 [shape = 'u8[8192]{0}', space=vmem, size = 0x2000, scoped, tag = 'output window, operand 0']
    #allocation3 [shape = 's32[2]{0}', space=sflag, size = 0x8, scoped, tag = 'scoped memory for tpu_custom_call.1']
    %11 = vsyncpa [#allocation3], 0
    %s12 = scalar_lea.sflag [#allocation3], 1
    %13 = vsyncpa %s12, 0
    loop: start=0, step=1, limit=4
    $region2: #{tpu_custom_call.1} parent=1 // loop_pre_header
      _
    $region3: #{tpu_custom_call.1} parent=1 // loop_header
      %s15 = sphi 0, %s19
      %p16 = scmp.ge.s32.totalorder %s15, 4
      %s25 = sphi 0, %s27
      %s28 = sphi 0, %s25
      %s29 = sphi 0, %s28
      %s45 = sphi 0, %s29
      %s51 = sphi 0, %s53
      %s54 = sphi 0, %s51
      %s55 = sphi 0, %s54
      %s71 = sphi 0, %s55
      %s77 = sphi 0, %s79
      %s80 = sphi 0, %s77
      %s81 = sphi 0, %s80
      %s97 = sphi 0, %s81
      %s101 = sphi 0, %s101
      %s103 = sphi 0, %s101
      %s104 = sphi 0, %s103
      %s118 = sphi 0, %s104
      %s122 = sphi 0, %s122
      %s124 = sphi 0, %s122
      %s125 = sphi 0, %s124
      %s139 = sphi 0, %s125
      %s143 = sphi 0, %s143
      %s145 = sphi 0, %s143
      %s146 = sphi 0, %s145
      %s160 = sphi 0, %s146
      %s166 = sphi 0, %s168
      %s169 = sphi 0, %s166
      %s170 = sphi 0, %s169
      %s186 = sphi 0, %s170
    $region4: #{tpu_custom_call.1} parent=1 // loop_header_branch
      %18 = sbr.rel (%p16) target = $region8
    $region5: #{tpu_custom_call.1} parent=1 // loop_body
      %s20 = ssub.s32 %s15, 1
      %s21 = ssub.s32 %s15, 2
      %s22 = sadd.s32 %s15, 1
      %s23 = ssub.s32 %s15, %s22
      %p24 = scmp.eq.s32.totalorder %s23, 0
      %s26 = sadd.s32 %s25, 1
      %s27 = scalar_select %p24, %s25, %s26
      %p30 = pneg %p24
      %p31 = scmp.eq.s32.totalorder %s15, 1
      %p32 = por %p30, %p31
      %p33 = scmp.ne.s32.totalorder %s25, %s28
      %p34 = scmp.eq.s32.totalorder %s15, 0
      %p35 = por %p33, %p34
      %p36 = scmp.ne.s32.totalorder %s25, %s28
      %p37 = scmp.eq.s32.totalorder %s20, 1
      %p38 = por %p36, %p37
      %p39 = scmp.ne.s32.totalorder %s28, %s29
      %p40 = scmp.eq.s32.totalorder %s20, 0
      %p41 = por %p39, %p40
      %p42 = scmp.ne.s32.totalorder %s28, %s29
      %p43 = scmp.eq.s32.totalorder %s21, 1
      %p44 = por %p42, %p43
      %p46 = scmp.ne.s32.totalorder %s29, %s45
      %p47 = scmp.eq.s32.totalorder %s21, 0
      %p48 = por %p46, %p47
      %s49 = ssub.s32 %s15, %s22
      %p50 = scmp.eq.s32.totalorder %s49, 0
      %s52 = sadd.s32 %s51, 1
      %s53 = scalar_select %p50, %s51, %s52
      %p56 = pneg %p50
      %p57 = scmp.eq.s32.totalorder %s15, 1
      %p58 = por %p56, %p57
      %p59 = scmp.ne.s32.totalorder %s51, %s54
      %p60 = scmp.eq.s32.totalorder %s15, 0
      %p61 = por %p59, %p60
      %p62 = scmp.ne.s32.totalorder %s51, %s54
      %p63 = scmp.eq.s32.totalorder %s20, 1
      %p64 = por %p62, %p63
      %p65 = scmp.ne.s32.totalorder %s54, %s55
      %p66 = scmp.eq.s32.totalorder %s20, 0
      %p67 = por %p65, %p66
      %p68 = scmp.ne.s32.totalorder %s54, %s55
      %p69 = scmp.eq.s32.totalorder %s21, 1
      %p70 = por %p68, %p69
      %p72 = scmp.ne.s32.totalorder %s55, %s71
      %p73 = scmp.eq.s32.totalorder %s21, 0
      %p74 = por %p72, %p73
      %s75 = ssub.s32 %s15, %s22
      %p76 = scmp.eq.s32.totalorder %s75, 0
      %s78 = sadd.s32 %s77, 1
      %s79 = scalar_select %p76, %s77, %s78
      %p82 = pneg %p76
      %p83 = scmp.eq.s32.totalorder %s15, 1
      %p84 = por %p82, %p83
      %p85 = scmp.ne.s32.totalorder %s77, %s80
      %p86 = scmp.eq.s32.totalorder %s15, 0
      %p87 = por %p85, %p86
      %p88 = scmp.ne.s32.totalorder %s77, %s80
      %p89 = scmp.eq.s32.totalorder %s20, 1
      %p90 = por %p88, %p89
      %p91 = scmp.ne.s32.totalorder %s80, %s81
      %p92 = scmp.eq.s32.totalorder %s20, 0
      %p93 = por %p91, %p92
      %p94 = scmp.ne.s32.totalorder %s80, %s81
      %p95 = scmp.eq.s32.totalorder %s21, 1
      %p96 = por %p94, %p95
      %p98 = scmp.ne.s32.totalorder %s81, %s97
      %p99 = scmp.eq.s32.totalorder %s21, 0
      %p100 = por %p98, %p99
      %s102 = sadd.s32 %s101, 1
      %p105 = scmp.eq.s32.totalorder %s15, 1
      %p106 = scmp.ne.s32.totalorder %s101, %s103
      %p107 = scmp.eq.s32.totalorder %s15, 0
      %p108 = por %p106, %p107
      %p109 = scmp.ne.s32.totalorder %s101, %s103
      %p110 = scmp.eq.s32.totalorder %s20, 1
      %p111 = por %p109, %p110
      %p112 = scmp.ne.s32.totalorder %s103, %s104
      %p113 = scmp.eq.s32.totalorder %s20, 0
      %p114 = por %p112, %p113
      %p115 = scmp.ne.s32.totalorder %s103, %s104
      %p116 = scmp.eq.s32.totalorder %s21, 1
      %p117 = por %p115, %p116
      %p119 = scmp.ne.s32.totalorder %s104, %s118
      %p120 = scmp.eq.s32.totalorder %s21, 0
      %p121 = por %p119, %p120
      %s123 = sadd.s32 %s122, 1
      %p126 = scmp.eq.s32.totalorder %s15, 1
      %p127 = scmp.ne.s32.totalorder %s122, %s124
      %p128 = scmp.eq.s32.totalorder %s15, 0
      %p129 = por %p127, %p128
      %p130 = scmp.ne.s32.totalorder %s122, %s124
      %p131 = scmp.eq.s32.totalorder %s20, 1
      %p132 = por %p130, %p131
      %p133 = scmp.ne.s32.totalorder %s124, %s125
      %p134 = scmp.eq.s32.totalorder %s20, 0
      %p135 = por %p133, %p134
      %p136 = scmp.ne.s32.totalorder %s124, %s125
      %p137 = scmp.eq.s32.totalorder %s21, 1
      %p138 = por %p136, %p137
      %p140 = scmp.ne.s32.totalorder %s125, %s139
      %p141 = scmp.eq.s32.totalorder %s21, 0
      %p142 = por %p140, %p141
      %s144 = sadd.s32 %s143, 1
      %p147 = scmp.eq.s32.totalorder %s15, 1
      %p148 = scmp.ne.s32.totalorder %s143, %s145
      %p149 = scmp.eq.s32.totalorder %s15, 0
      %p150 = por %p148, %p149
      %p151 = scmp.ne.s32.totalorder %s143, %s145
      %p152 = scmp.eq.s32.totalorder %s20, 1
      %p153 = por %p151, %p152
      %p154 = scmp.ne.s32.totalorder %s145, %s146
      %p155 = scmp.eq.s32.totalorder %s20, 0
      %p156 = por %p154, %p155
      %p157 = scmp.ne.s32.totalorder %s145, %s146
      %p158 = scmp.eq.s32.totalorder %s21, 1
      %p159 = por %p157, %p158
      %p161 = scmp.ne.s32.totalorder %s146, %s160
      %p162 = scmp.eq.s32.totalorder %s21, 0
      %p163 = por %p161, %p162
      %s164 = ssub.s32 %s15, %s22
      %p165 = scmp.eq.s32.totalorder %s164, 0
      %s167 = sadd.s32 %s166, 1
      %s168 = scalar_select %p165, %s166, %s167
      %p171 = pneg %p165
      %p172 = scmp.eq.s32.totalorder %s15, 1
      %p173 = por %p171, %p172
      %p174 = scmp.ne.s32.totalorder %s166, %s169
      %p175 = scmp.eq.s32.totalorder %s15, 0
      %p176 = por %p174, %p175
      %p177 = scmp.ne.s32.totalorder %s166, %s169
      %p178 = scmp.eq.s32.totalorder %s20, 1
      %p179 = por %p177, %p178
      %p180 = scmp.ne.s32.totalorder %s169, %s170
      %p181 = scmp.eq.s32.totalorder %s20, 0
      %p182 = por %p180, %p181
      %p183 = scmp.ne.s32.totalorder %s169, %s170
      %p184 = scmp.eq.s32.totalorder %s21, 1
      %p185 = por %p183, %p184
      %p187 = scmp.ne.s32.totalorder %s170, %s186
      %p188 = scmp.eq.s32.totalorder %s21, 0
      %p189 = por %p187, %p188
      %p190 = scmp.le.s32.totalorder 1, %s15
      %p191 = scmp.lt.s32.totalorder %s15, 3
      %p192 = pnand %p190, %p191
      %p193 = pneg %p192
      // Predicated region
      $region9: #{tpu_custom_call.1} parent=5 // pred_check
        _
      $region10: #{tpu_custom_call.1} parent=5 // pred_check_branch
        %195 = sbr.rel (%p192) target = $region12
      $region11: #{tpu_custom_call.1} parent=5 // pred_region
        %s196 = ssub.s32 %s15, 1
        // Predicated region
        $region13: #{tpu_custom_call.1} parent=11 // pred_check
          %p197 = pneg %p114
        $region14: #{tpu_custom_call.1} parent=11 // pred_check_branch
          %199 = sbr.rel (%p197) target = $region16
        $region15: #{tpu_custom_call.1} parent=11 // pred_region
          _
        $region16: #{tpu_custom_call.1} parent=11 // pred_fallthru
          _
        // Predicated region
        $region17: #{tpu_custom_call.1} parent=11 // pred_check
          %p200 = pneg %p135
        $region18: #{tpu_custom_call.1} parent=11 // pred_check_branch
          %202 = sbr.rel (%p200) target = $region20
        $region19: #{tpu_custom_call.1} parent=11 // pred_region
          _
        $region20: #{tpu_custom_call.1} parent=11 // pred_fallthru
          _
        // Predicated region
        $region21: #{tpu_custom_call.1} parent=11 // pred_check
          %p203 = pneg %p156
        $region22: #{tpu_custom_call.1} parent=11 // pred_check_branch
          %205 = sbr.rel (%p203) target = $region24
        $region23: #{tpu_custom_call.1} parent=11 // pred_region
          _
        $region24: #{tpu_custom_call.1} parent=11 // pred_fallthru
          _
      $region12: #{tpu_custom_call.1} parent=5 // pred_fallthru
        _
      %p206 = scmp.lt.s32.totalorder %s15, 2
      // Predicated region
      $region25: #{tpu_custom_call.1} parent=5 // pred_check
        %p207 = pneg %p206
      $region26: #{tpu_custom_call.1} parent=5 // pred_check_branch
        %209 = sbr.rel (%p207) target = $region28
      $region27: #{tpu_custom_call.1} parent=5 // pred_region
        // Predicated region
        $region29: #{tpu_custom_call.1} parent=27 // pred_check
          %p210 = pneg %p35
        $region30: #{tpu_custom_call.1} parent=27 // pred_check_branch
          %212 = sbr.rel (%p210) target = $region32
        $region31: #{tpu_custom_call.1} parent=27 // pred_region
          %p213 = scmp.lt.s32.totalorder %s15, 1
          %s214 = scalar_select %p213, %s15, 1
          %s215 = smul.addr %s214, 8
          %s216 = scalar_lea.vmem %s0, %s215
        $region32: #{tpu_custom_call.1} parent=27 // pred_fallthru
          _
        // Predicated region
        $region33: #{tpu_custom_call.1} parent=27 // pred_check
          %p217 = pneg %p61
        $region34: #{tpu_custom_call.1} parent=27 // pred_check_branch
          %219 = sbr.rel (%p217) target = $region36
        $region35: #{tpu_custom_call.1} parent=27 // pred_region
          %p220 = scmp.lt.s32.totalorder %s15, 1
          %s221 = scalar_select %p220, %s15, 1
          %s222 = smul.addr %s221, 2
          %s223 = smul.addr %s222, 4
          %s224 = scalar_lea.vmem %s1, %s223
        $region36: #{tpu_custom_call.1} parent=27 // pred_fallthru
          _
        // Predicated region
        $region37: #{tpu_custom_call.1} parent=27 // pred_check
          %p225 = pneg %p87
        $region38: #{tpu_custom_call.1} parent=27 // pred_check_branch
          %227 = sbr.rel (%p225) target = $region40
        $region39: #{tpu_custom_call.1} parent=27 // pred_region
          %p228 = scmp.lt.s32.totalorder %s15, 1
          %s229 = scalar_select %p228, %s15, 1
          %s230 = scalar_lea.vmem %s2, %s229
        $region40: #{tpu_custom_call.1} parent=27 // pred_fallthru
          _
      $region28: #{tpu_custom_call.1} parent=5 // pred_fallthru
        _
      %p231 = scmp.le.s32.totalorder 1, %s15
      %p232 = scmp.lt.s32.totalorder %s15, 3
      %p233 = pnand %p231, %p232
      %p234 = pneg %p233
      // Predicated region
      $region41: #{tpu_custom_call.1} parent=5 // pred_check
        _
      $region42: #{tpu_custom_call.1} parent=5 // pred_check_branch
        %236 = sbr.rel (%p233) target = $region44
      $region43: #{tpu_custom_call.1} parent=5 // pred_region
        %s237 = ssub.s32 %s15, 1
        %p238 = scmp.lt.s32.totalorder %s20, 1
        %s239 = scalar_select %p238, %s20, 1
        %s240 = smul.addr %s239, 8
        %s241 = scalar_lea.vmem %s0, %s240
        %p242 = pneg %p41
        %p243 = pneg %p38
        %p244 = scmp.lt.s32.totalorder %s20, 1
        %s245 = scalar_select %p244, %s20, 1
        %s246 = smul.addr %s245, 2
        %s247 = smul.addr %s246, 4
        %s248 = scalar_lea.vmem %s1, %s247
        %p249 = pneg %p67
        %p250 = pneg %p64
        %p251 = scmp.lt.s32.totalorder %s20, 1
        %s252 = scalar_select %p251, %s20, 1
        %s253 = scalar_lea.vmem %s2, %s252
        %p254 = pneg %p93
        %p255 = pneg %p90
        %p256 = pneg %p114
        %p257 = pneg %p111
        %p258 = pneg %p135
        %p259 = pneg %p132
        %p260 = pneg %p156
        %p261 = pneg %p153
        %p262 = pneg %p182
        %p263 = pneg %p179
        %s264 = sand.u32 %s169, 1
        %s265 = scalar_lea.sflag [#allocation3], %s264
        %s266 = sand.u32 %s169, 1
        %s267 = smul.addr %s266, 8
        %s268 = scalar_lea.vmem [#allocation2], %s267
        %p269 = scmp.lt.s32.totalorder %s20, 1
        %s270 = scalar_select %p269, %s20, 1
        %s271 = smul.addr %s270, 8
        %s272 = scalar_lea.vmem %s0, %s271
        %p273 = scmp.lt.s32.totalorder %s20, 1
        %s274 = scalar_select %p273, %s20, 1
        %s275 = smul.addr %s274, 2
        %s276 = smul.addr %s275, 4
        %s277 = scalar_lea.vmem %s1, %s276
        %p278 = scmp.lt.s32.totalorder %s20, 1
        %s279 = scalar_select %p278, %s20, 1
        %s280 = scalar_lea.vmem %s2, %s279
        %v282 = vld [vmem:[%s272] sm:$0xff]
        %v283 = vpack.c.bf16 %v282, %v282
        %v284 = vld [vmem:[%s277] sm:$0xf]
        %v285 = vld [vmem:[%s277 + $0x4] sm:$0xf]
        %v286 = vld [vmem:[%s3] sm:$0xf]
        %v287 = vld [vmem:[%s3 + $0x4] sm:$0xf]
        %v288 = vld [vmem:[%s3 + $0x8] sm:$0xf]
        %v289 = vld [vmem:[%s3 + $0xc] sm:$0xf]
        %v290 = vld [vmem:[%s4] sm:$0xf]
        %v291 = vld [vmem:[%s4 + $0x4] sm:$0xf]
        %v292 = vld [vmem:[%s4 + $0x8] sm:$0xf]
        %v293 = vld [vmem:[%s4 + $0xc] sm:$0xf]
        %v294 = vld [vmem:[%s4 + $0x10] sm:$0xf]
        %v295 = vld [vmem:[%s4 + $0x14] sm:$0xf]
        %v296 = vld [vmem:[%s4 + $0x18] sm:$0xf]
        %v297 = vld [vmem:[%s4 + $0x1c] sm:$0xf]
        %v298 = vld [vmem:[%s4 + $0x20] sm:$0xf]
        %v299 = vld [vmem:[%s4 + $0x24] sm:$0xf]
        %v300 = vld [vmem:[%s4 + $0x28] sm:$0xf]
        %v301 = vld [vmem:[%s4 + $0x2c] sm:$0xf]
        %v302 = vld [vmem:[%s4 + $0x30] sm:$0xf]
        %v303 = vld [vmem:[%s4 + $0x34] sm:$0xf]
        %v304 = vld [vmem:[%s4 + $0x38] sm:$0xf]
        %v305 = vld [vmem:[%s4 + $0x3c] sm:$0xf]
        %v306 = vld [vmem:[%s5] sm:$0xff]
        %v307 = vperm.slane %v306, 0
        %v312 = vunpack.c.l.b16 %v286
        %v313 = vunpack.c.l.b16 %v287
        %v314 = vunpack.c.l.b16 %v288
        %v315 = vunpack.c.l.b16 %v289
        %v316 = vpack.c.b16 %v313, %v312
        %v317 = vpack.c.b16 %v315, %v314
        %vm320 = vcmask 261120
        %v322 = vsel %vm320, %v283, 0
        %324 = vmatpush.bf16.msra.mxu0 0
        %325 = vmatpush.bf16.msra.mxu0 0
        %326 = vmatpush.bf16.msra.mxu0 0
        %327 = vmatpush.bf16.msra.mxu0 0
        %328 = vmatpush.bf16.msra.mxu0 0
        %329 = vmatpush.bf16.msra.mxu0 0
        %330 = vmatpush.bf16.msra.mxu0 %v317
        %331 = vmatpush.bf16.msra.mxu0 %v316
        %332 = vmatmul.bf16.gmra.mxu0 %v322
        %v333 = vpop.f32.mrf.mxu0
        %v334 = vadd.f32 %v307, %v333
        %v335 = vpop.f32.mrf.mxu0
        %336 = vdwg.mxu0
        %v339 = vunpack.c.l.b16 %v284
        %v340 = vunpack.c.l.b16 %v285
        %v341 = vpack.c.b16 %v340, %v339
        %342 = vrot.lane.b32.xlu0 %v316, 96
        %v343 = vpop.permute.xlu0 %342
        %344 = vrot.lane.b32.xlu0 %v317, 96
        %v345 = vpop.permute.xlu0 %344
        %v349 = vsel %vm320, %v341, 0
        %351 = vmatpush.bf16.msra.mxu0 0
        %352 = vmatpush.bf16.msra.mxu0 0
        %353 = vmatpush.bf16.msra.mxu0 0
        %354 = vmatpush.bf16.msra.mxu0 0
        %355 = vmatpush.bf16.msra.mxu0 0
        %356 = vmatpush.bf16.msra.mxu0 0
        %357 = vmatpush.bf16.msra.mxu0 %v345
        %358 = vmatpush.bf16.msra.mxu0 %v343
        %359 = vmatmul.bf16.gmra.mxu0 %v349
        %v360 = vpop.f32.mrf.mxu0
        %v361 = vadd.f32 0.0, %v360
        %v362 = vpop.f32.mrf.mxu0
        %v363 = vadd.f32 0.0, %v362
        %364 = vdwg.mxu0
        %v365 = vperm.slane %v306, 1
        %v366 = vadd.f32 %v361, %v365
        %v367 = vadd.f32 %v363, %v365
        %v368 = vperm.slane %v306, 2
        %370 = vrot.lane.b32.xlu0 %v368, 32
        %v371 = vpop.permute.xlu0 %370
        %v373 = vadd.f32 %v361, %v371
        %v374 = vadd.f32 %v363, %v371
        %v375 = vpack.c.bf16 %v366, %v366
        %v376 = vpack.c.bf16 %v367, %v367
        %v379 = vunpack.c.l.b16 %v375
        %v380 = vunpack.c.l.b16 %v376
        %v381 = vpack.c.b16 %v380, %v379
        %v383 = vunpack.c.l.bf16 %v381
        %v384 = vunpack.c.h.bf16 %v381
        %v385 = vunpack.c.l.bf16 %v290
        %v386 = vunpack.c.l.bf16 %v291
        %v387 = vunpack.c.l.bf16 %v292
        %v388 = vunpack.c.l.bf16 %v293
        %v389 = vunpack.c.l.bf16 %v294
        %v390 = vunpack.c.l.bf16 %v295
        %v391 = vunpack.c.l.bf16 %v296
        %v392 = vunpack.c.l.bf16 %v297
        %v393 = vunpack.c.l.bf16 %v298
        %v394 = vunpack.c.l.bf16 %v299
        %v395 = vunpack.c.l.bf16 %v300
        %v396 = vunpack.c.l.bf16 %v301
        %v397 = vunpack.c.l.bf16 %v302
        %v398 = vunpack.c.l.bf16 %v303
        %v399 = vunpack.c.l.bf16 %v304
        %v400 = vunpack.c.l.bf16 %v305
        %v401 = vmul.f32 %v383, %v385
        %v402 = vmul.f32 %v384, %v386
        %v403 = vmul.f32 %v383, %v387
        %v404 = vmul.f32 %v384, %v388
        %v405 = vmul.f32 %v383, %v389
        %v406 = vmul.f32 %v384, %v390
        %v407 = vmul.f32 %v383, %v391
        %v408 = vmul.f32 %v384, %v392
        %v409 = vmul.f32 %v383, %v393
        %v410 = vmul.f32 %v384, %v394
        %v411 = vmul.f32 %v383, %v395
        %v412 = vmul.f32 %v384, %v396
        %v413 = vmul.f32 %v383, %v397
        %v414 = vmul.f32 %v384, %v398
        %v415 = vmul.f32 %v383, %v399
        %v416 = vmul.f32 %v384, %v400
        %v417 = vpack.c.bf16 %v402, %v401
        %v418 = vpack.c.bf16 %v404, %v403
        %v419 = vpack.c.bf16 %v406, %v405
        %v420 = vpack.c.bf16 %v408, %v407
        %v421 = vpack.c.bf16 %v410, %v409
        %v422 = vpack.c.bf16 %v412, %v411
        %v423 = vpack.c.bf16 %v414, %v413
        %v424 = vpack.c.bf16 %v416, %v415
        %v425 = vpack.c.bf16 %v373, %v373
        %v426 = vpack.c.bf16 %v374, %v374
        %v429 = vunpack.c.l.b16 %v425
        %v430 = vunpack.c.l.b16 %v426
        %v431 = vpack.c.b16 %v430, %v429
        %v433 = vunpack.c.l.bf16 %v431
        %v434 = vunpack.c.h.bf16 %v431
        %451 = vrot.lane.b32.xlu0 %v385, 32
        %v452 = vpop.permute.xlu0 %451
        %453 = vrot.lane.b32.xlu0 %v386, 32
        %v454 = vpop.permute.xlu0 %453
        %455 = vrot.lane.b32.xlu0 %v387, 32
        %v456 = vpop.permute.xlu0 %455
        %457 = vrot.lane.b32.xlu0 %v388, 32
        %v458 = vpop.permute.xlu0 %457
        %459 = vrot.lane.b32.xlu0 %v389, 32
        %v460 = vpop.permute.xlu0 %459
        %461 = vrot.lane.b32.xlu0 %v390, 32
        %v462 = vpop.permute.xlu0 %461
        %463 = vrot.lane.b32.xlu0 %v391, 32
        %v464 = vpop.permute.xlu0 %463
        %465 = vrot.lane.b32.xlu0 %v392, 32
        %v466 = vpop.permute.xlu0 %465
        %467 = vrot.lane.b32.xlu0 %v393, 32
        %v468 = vpop.permute.xlu0 %467
        %469 = vrot.lane.b32.xlu0 %v394, 32
        %v470 = vpop.permute.xlu0 %469
        %471 = vrot.lane.b32.xlu0 %v395, 32
        %v472 = vpop.permute.xlu0 %471
        %473 = vrot.lane.b32.xlu0 %v396, 32
        %v474 = vpop.permute.xlu0 %473
        %475 = vrot.lane.b32.xlu0 %v397, 32
        %v476 = vpop.permute.xlu0 %475
        %477 = vrot.lane.b32.xlu0 %v398, 32
        %v478 = vpop.permute.xlu0 %477
        %479 = vrot.lane.b32.xlu0 %v399, 32
        %v480 = vpop.permute.xlu0 %479
        %481 = vrot.lane.b32.xlu0 %v400, 32
        %v482 = vpop.permute.xlu0 %481
        %v499 = vmul.f32 %v433, %v452
        %v500 = vmul.f32 %v434, %v454
        %v501 = vmul.f32 %v433, %v456
        %v502 = vmul.f32 %v434, %v458
        %v503 = vmul.f32 %v433, %v460
        %v504 = vmul.f32 %v434, %v462
        %v505 = vmul.f32 %v433, %v464
        %v506 = vmul.f32 %v434, %v466
        %v507 = vmul.f32 %v433, %v468
        %v508 = vmul.f32 %v434, %v470
        %v509 = vmul.f32 %v433, %v472
        %v510 = vmul.f32 %v434, %v474
        %v511 = vmul.f32 %v433, %v476
        %v512 = vmul.f32 %v434, %v478
        %v513 = vmul.f32 %v433, %v480
        %v514 = vmul.f32 %v434, %v482
        %v515 = vpack.c.bf16 %v499, %v499
        %v516 = vpack.c.bf16 %v500, %v500
        %v517 = vpack.c.bf16 %v501, %v501
        %v518 = vpack.c.bf16 %v502, %v502
        %v519 = vpack.c.bf16 %v503, %v503
        %v520 = vpack.c.bf16 %v504, %v504
        %v521 = vpack.c.bf16 %v505, %v505
        %v522 = vpack.c.bf16 %v506, %v506
        %v523 = vpack.c.bf16 %v507, %v507
        %v524 = vpack.c.bf16 %v508, %v508
        %v525 = vpack.c.bf16 %v509, %v509
        %v526 = vpack.c.bf16 %v510, %v510
        %v527 = vpack.c.bf16 %v511, %v511
        %v528 = vpack.c.bf16 %v512, %v512
        %v529 = vpack.c.bf16 %v513, %v513
        %v530 = vpack.c.bf16 %v514, %v514
        %v531 = vpack.c.bf16 %v334, %v334
        %v533 = vsel %vm320, %v531, 0
        %v536 = vsel %vm320, %v417, 0
        %v539 = vsel %vm320, %v418, 0
        %v542 = vsel %vm320, %v419, 0
        %v545 = vsel %vm320, %v420, 0
        %v548 = vsel %vm320, %v421, 0
        %v551 = vsel %vm320, %v422, 0
        %v554 = vsel %vm320, %v423, 0
        %v557 = vsel %vm320, %v424, 0
        %559 = vmatpush.bf16.xpose.msra.mxu0 %v557
        %560 = vmatpush.bf16.xpose.msra.mxu0 %v554
        %561 = vmatpush.bf16.xpose.msra.mxu0 %v551
        %562 = vmatpush.bf16.xpose.msra.mxu0 %v548
        %563 = vmatpush.bf16.xpose.msra.mxu0 %v545
        %564 = vmatpush.bf16.xpose.msra.mxu0 %v542
        %565 = vmatpush.bf16.xpose.msra.mxu0 %v539
        %566 = vmatpush.bf16.xpose.msra.mxu0 %v536
        %567 = vmatmul.bf16.gmra.mxu0 %v533
        %v568 = vpop.f32.mrf.mxu0
        %v569 = vadd.f32 0.0, %v568
        %v570 = vpop.f32.mrf.mxu0
        %571 = vdwg.mxu0
        %v572 = vmul.f32 %v569, 0.5
        %v573 = vld [vmem:[%s280] sm:$0x1]
        %v575 = vperm.slane %v573, 0
        %576 = vrot.lane.b32.xlu0 %v575, 16
        %v577 = vpop.permute.xlu0 %576
        %579 = vrot.lane.b32.xlu0 %v575, 32
        %v580 = vpop.permute.xlu0 %579
        %582 = vrot.lane.b32.xlu0 %v575, 48
        %v583 = vpop.permute.xlu0 %582
        %585 = vrot.lane.b32.xlu0 %v575, 64
        %v586 = vpop.permute.xlu0 %585
        %588 = vrot.lane.b32.xlu0 %v575, 80
        %v589 = vpop.permute.xlu0 %588
        %591 = vrot.lane.b32.xlu0 %v575, 96
        %v592 = vpop.permute.xlu0 %591
        %594 = vrot.lane.b32.xlu0 %v575, 112
        %v595 = vpop.permute.xlu0 %594
        %vm597 = vcmask 130048
        %v598 = vsel %vm597, %v573, %v577
        %v599 = vsel %vm320, %v598, %v580
        %vm600 = vcmask 392192
        %v601 = vsel %vm600, %v599, %v583
        %vm602 = vcmask 523264
        %v603 = vsel %vm602, %v601, %v586
        %vm604 = vcmask 654336
        %v605 = vsel %vm604, %v603, %v589
        %vm606 = vcmask 785408
        %v607 = vsel %vm606, %v605, %v592
        %vm608 = vcmask 916480
        %v609 = vsel %vm608, %v607, %v595
        %v610 = vperm.slane %v609, 0
        %v611 = vadd.f32 %v572, %v610
        %612 = vmax.xlane.f32.xlu0 %v611
        %v613 = vpop.xlane.xlu0 %612
        %v614 = vsub.f32 %v611, %v613
        %v615 = vmul.f32 %v614, 1.442695
        %v616 = vpow.pop %v615
        %v633 = vunpack.c.l.b16 %v515
        %v634 = vunpack.c.l.b16 %v516
        %v635 = vunpack.c.l.b16 %v517
        %v636 = vunpack.c.l.b16 %v518
        %v637 = vunpack.c.l.b16 %v519
        %v638 = vunpack.c.l.b16 %v520
        %v639 = vunpack.c.l.b16 %v521
        %v640 = vunpack.c.l.b16 %v522
        %v641 = vunpack.c.l.b16 %v523
        %v642 = vunpack.c.l.b16 %v524
        %v643 = vunpack.c.l.b16 %v525
        %v644 = vunpack.c.l.b16 %v526
        %v645 = vunpack.c.l.b16 %v527
        %v646 = vunpack.c.l.b16 %v528
        %v647 = vunpack.c.l.b16 %v529
        %v648 = vunpack.c.l.b16 %v530
        %v649 = vpack.c.b16 %v634, %v633
        %v650 = vpack.c.b16 %v636, %v635
        %v651 = vpack.c.b16 %v638, %v637
        %v652 = vpack.c.b16 %v640, %v639
        %v653 = vpack.c.b16 %v642, %v641
        %v654 = vpack.c.b16 %v644, %v643
        %v655 = vpack.c.b16 %v646, %v645
        %v656 = vpack.c.b16 %v648, %v647
        %657 = vrot.lane.b32.xlu0 %v649, 96
        %v658 = vpop.permute.xlu0 %657
        %659 = vrot.lane.b32.xlu0 %v650, 96
        %v660 = vpop.permute.xlu0 %659
        %661 = vrot.lane.b32.xlu0 %v651, 96
        %v662 = vpop.permute.xlu0 %661
        %663 = vrot.lane.b32.xlu0 %v652, 96
        %v664 = vpop.permute.xlu0 %663
        %665 = vrot.lane.b32.xlu0 %v653, 96
        %v666 = vpop.permute.xlu0 %665
        %667 = vrot.lane.b32.xlu0 %v654, 96
        %v668 = vpop.permute.xlu0 %667
        %669 = vrot.lane.b32.xlu0 %v655, 96
        %v670 = vpop.permute.xlu0 %669
        %671 = vrot.lane.b32.xlu0 %v656, 96
        %v672 = vpop.permute.xlu0 %671
        %v689 = vunpack.c.l.b16 %v290
        %v690 = vunpack.c.l.b16 %v291
        %v691 = vunpack.c.l.b16 %v292
        %v692 = vunpack.c.l.b16 %v293
        %v693 = vunpack.c.l.b16 %v294
        %v694 = vunpack.c.l.b16 %v295
        %v695 = vunpack.c.l.b16 %v296
        %v696 = vunpack.c.l.b16 %v297
        %v697 = vunpack.c.l.b16 %v298
        %v698 = vunpack.c.l.b16 %v299
        %v699 = vunpack.c.l.b16 %v300
        %v700 = vunpack.c.l.b16 %v301
        %v701 = vunpack.c.l.b16 %v302
        %v702 = vunpack.c.l.b16 %v303
        %v703 = vunpack.c.l.b16 %v304
        %v704 = vunpack.c.l.b16 %v305
        %v705 = vpack.c.b16 %v690, %v689
        %v706 = vpack.c.b16 %v692, %v691
        %v707 = vpack.c.b16 %v694, %v693
        %v708 = vpack.c.b16 %v696, %v695
        %v709 = vpack.c.b16 %v698, %v697
        %v710 = vpack.c.b16 %v700, %v699
        %v711 = vpack.c.b16 %v702, %v701
        %v712 = vpack.c.b16 %v704, %v703
        %713 = vrot.lane.b32.xlu0 %v705, 32
        %v714 = vpop.permute.xlu0 %713
        %715 = vrot.lane.b32.xlu0 %v706, 32
        %v716 = vpop.permute.xlu0 %715
        %717 = vrot.lane.b32.xlu0 %v707, 32
        %v718 = vpop.permute.xlu0 %717
        %719 = vrot.lane.b32.xlu0 %v708, 32
        %v720 = vpop.permute.xlu0 %719
        %721 = vrot.lane.b32.xlu0 %v709, 32
        %v722 = vpop.permute.xlu0 %721
        %723 = vrot.lane.b32.xlu0 %v710, 32
        %v724 = vpop.permute.xlu0 %723
        %725 = vrot.lane.b32.xlu0 %v711, 32
        %v726 = vpop.permute.xlu0 %725
        %727 = vrot.lane.b32.xlu0 %v712, 32
        %v728 = vpop.permute.xlu0 %727
        %v731 = vsel %vm320, %v658, %v714
        %v735 = vsel %vm320, %v660, %v716
        %v739 = vsel %vm320, %v662, %v718
        %v743 = vsel %vm320, %v664, %v720
        %v747 = vsel %vm320, %v666, %v722
        %v751 = vsel %vm320, %v668, %v724
        %v755 = vsel %vm320, %v670, %v726
        %v759 = vsel %vm320, %v672, %v728
        %v761 = vpack.c.bf16 %v616, %v616
        %762 = vmatpush.bf16.msra.mxu0 %v759
        %763 = vmatpush.bf16.msra.mxu0 %v755
        %764 = vmatpush.bf16.msra.mxu0 %v751
        %765 = vmatpush.bf16.msra.mxu0 %v747
        %766 = vmatpush.bf16.msra.mxu0 %v743
        %767 = vmatpush.bf16.msra.mxu0 %v739
        %768 = vmatpush.bf16.msra.mxu0 %v735
        %769 = vmatpush.bf16.msra.mxu0 %v731
        %770 = vmatmul.bf16.gmra.mxu0 %v761
        %v771 = vpop.f32.mrf.mxu0
        %v772 = vadd.f32 0.0, %v771
        %v773 = vpop.f32.mrf.mxu0
        %774 = vdwg.mxu0
        %v775 = vmax.f32 %v772, 1e-20
        %777 = vrot.lane.b32.xlu0 %v775, 96
        %v778 = vpop.permute.xlu0 %777
        %v780 = vrcp.pop %v778
        %v781 = vmul.f32 %v778, %v780
        %v782 = vsub.f32 1.0, %v781
        %v783 = vmul.f32 %v780, %v782
        %v784 = vadd.f32 %v780, %v783
        %vm785 = vweird.f32 %v778
        %vm786 = vweird.f32 %v780
        %vm787 = vmor %vm785, %vm786
        %v788 = vsel %vm787, %v780, %v784
        %v789 = vand.u32 2147483647, %v778
        %vm790 = vcmp.eq.f32.partialorder %v789, 8.507059e+37
        %v791 = vand.u32 %v778, 2147483648
        %v792 = vor.u32 1.1754944e-38, %v791
        %v793 = vsel %vm790, %v792, %v788
        %v794 = vmul.f32 %v772, %v793
        %v795 = vpack.c.bf16 %v794, %v794
        %v796 = vperm.slane %v306, 3
        %797 = vrot.lane.b32.xlu0 %v316, 32
        %v798 = vpop.permute.xlu0 %797
        %799 = vrot.lane.b32.xlu0 %v317, 32
        %v800 = vpop.permute.xlu0 %799
        %v804 = vsel %vm320, %v795, 0
        %806 = vmatpush.bf16.msra.mxu0 0
        %807 = vmatpush.bf16.msra.mxu0 0
        %808 = vmatpush.bf16.msra.mxu0 0
        %809 = vmatpush.bf16.msra.mxu0 0
        %810 = vmatpush.bf16.msra.mxu0 0
        %811 = vmatpush.bf16.msra.mxu0 0
        %812 = vmatpush.bf16.msra.mxu0 %v800
        %813 = vmatpush.bf16.msra.mxu0 %v798
        %814 = vmatmul.bf16.gmra.mxu0 %v804
        %v815 = vpop.f32.mrf.mxu0
        %v816 = vadd.f32 %v796, %v815
        %v817 = vpop.f32.mrf.mxu0
        %818 = vdwg.mxu0
        %v819 = vadd.f32 %v282, %v816
        %v820 = vsel %vm320, %v819, 0.0
        %821 = vadd.xlane.f32.xlu0 %v820
        %v822 = vpop.xlane.xlu0 %821
        %v823 = vrcp.pop 32.0
        %v824 = vmul.f32 32.0, %v823
        %v825 = vsub.f32 1.0, %v824
        %v826 = vmul.f32 %v823, %v825
        %v827 = vadd.f32 %v823, %v826
        %vm828 = vweird.f32 %v823
        %v829 = vsel %vm828, %v823, %v827
        %v830 = vmul.f32 %v822, %v829
        %v831 = vmul.f32 %v819, %v819
        %v832 = vsel %vm320, %v831, 0.0
        %833 = vadd.xlane.f32.xlu0 %v832
        %v834 = vpop.xlane.xlu0 %833
        %v835 = vmul.f32 %v834, %v829
        %v836 = vmul.f32 %v830, %v830
        %v837 = vsub.f32 %v835, %v836
        %v838 = vmax.f32 %v837, 0.0
        %v839 = vsub.f32 %v819, %v830
        %v840 = vadd.f32 %v838, 1e-05
        %v841 = vrsqrt.pop %v840
        %v842 = vmul.f32 %v841, %v840
        %v843 = vmul.f32 %v842, %v841
        %v844 = vmul.f32 0.5, %v843
        %v845 = vsub.f32 1.5, %v844
        %v846 = vmul.f32 %v841, %v845
        %vm847 = vweird.f32 %v840
        %vm848 = vweird.f32 %v841
        %vm849 = vmor %vm847, %vm848
        %v850 = vsel %vm849, %v841, %v846
        %v851 = vmul.f32 %v839, %v850
        %v852 = vperm.slane %v306, 4
        %v853 = vmul.f32 %v851, %v852
        %v854 = vperm.slane %v306, 5
        %v855 = vadd.f32 %v853, %v854
        %856 = vst.msk [vmem:[%s268] sm:$0xff] %vm320, %v855
        %s857 = sand.u32 %s169, 1
        %s858 = scalar_lea.sflag [#allocation3], %s857
        %s859 = sand.u32 %s169, 1
        %s860 = smul.addr %s859, 8
        %s861 = scalar_lea.vmem [#allocation2], %s860
        // Predicated region
        $region45: #{tpu_custom_call.1} parent=43 // pred_check
          %p862 = pneg %p179
        $region46: #{tpu_custom_call.1} parent=43 // pred_check_branch
          %864 = sbr.rel (%p862) target = $region48
        $region47: #{tpu_custom_call.1} parent=43 // pred_region
          %866 = vsyncadd %s858, 0
          %s867 = smul.addr %s20, 8
          %s868 = scalar_lea.hbm %s6, %s867
          %s870 = sshll.u32 %s861, 4
          %s871 = int_to_ptr.vmem [resolvable:$true] %s870
          %s872 = sshll.u32 %s868, 4
          %s873 = int_to_ptr.hbm [resolvable:$true] %s872
          %875 = dma.vmem_to_hbm [thread:$0]  %s871, 128, %s873, %s858
        $region48: #{tpu_custom_call.1} parent=43 // pred_fallthru
          _
      $region44: #{tpu_custom_call.1} parent=5 // pred_fallthru
        _
      %p876 = scmp.le.s32.totalorder 2, %s15
      // Predicated region
      $region49: #{tpu_custom_call.1} parent=5 // pred_check
        %p877 = pneg %p876
      $region50: #{tpu_custom_call.1} parent=5 // pred_check_branch
        %879 = sbr.rel (%p877) target = $region52
      $region51: #{tpu_custom_call.1} parent=5 // pred_region
        %s880 = ssub.s32 %s15, 2
        // Predicated region
        $region53: #{tpu_custom_call.1} parent=51 // pred_check
          %p881 = pneg %p185
        $region54: #{tpu_custom_call.1} parent=51 // pred_check_branch
          %883 = sbr.rel (%p881) target = $region56
        $region55: #{tpu_custom_call.1} parent=51 // pred_region
          %s884 = sand.u32 %s170, 1
          %s885 = scalar_lea.sflag [#allocation3], %s884
          %s886 = sand.u32 %s170, 1
          %s887 = smul.addr %s886, 8
          %s888 = scalar_lea.vmem [#allocation2], %s887
          %890 = dma.done %s885, 128
        $region56: #{tpu_custom_call.1} parent=51 // pred_fallthru
          _
      $region52: #{tpu_custom_call.1} parent=5 // pred_fallthru
        _
    $region6: #{tpu_custom_call.1} parent=1 // loop_footer
      %s19 = sadd.s32 1, %s15
    $region7: #{tpu_custom_call.1} parent=1 // loop_footer_branch
      %14 = sbr.rel target = $region3
    $region8: #{tpu_custom_call.1} parent=1 // loop_exit
      _
    %891 = vsyncpa [#allocation3], 1
    %s892 = scalar_lea.sflag [#allocation3], 1
    %893 = vsyncpa %s892, 1

</llo_original>
